<compile_context>
chip_gen: v7x
topology: tpu7x:2x2x1
jax: 0.10.0
libtpu: 0.0.40
codegen_flags: <defaults>
</compile_context>

<pallas_src>
import math

import jax
import jax.numpy as jnp
from jax.experimental import pallas as pl
from jax.experimental.pallas import tpu as pltpu


# ----------------------------------------------------------------------------- helpers
def _round_up(n, m):
    return ((n + m - 1) // m) * m


def _vmem_cap_bytes():
    """Physical-VMEM-aware cap for vmem_limit_bytes (8 MiB compiler headroom)."""
    try:
        cap = int(pltpu.get_tpu_info().vmem_capacity_bytes)
    except Exception:
        cap = 64 << 20            # assume the smallest part (v7x) if the query fails
    return max(cap - (8 << 20), 32 << 20)


# ----------------------------------------------------------------------------- kernel
def _make_chained_mlp_kernel(chain_acts, compute_dtype):
    """x -> chain0 -> out0 -> chain1 -> out1 -> ...; all weights resident in VMEM.

    Each chain is a [Linear -> act]* sequence; its final (f32) activation is written
    to the corresponding output ref and also fed (in compute dtype) to the next chain.
    """
    chain_acts = tuple(tuple(a) for a in chain_acts)
    n_layers = sum(len(a) for a in chain_acts)
    n_out = len(chain_acts)

    def kernel(*refs):
        x_ref = refs[0]
        wb = refs[1:1 + 2 * n_layers]
        outs = refs[1 + 2 * n_layers:1 + 2 * n_layers + n_out]

        h = x_ref[...].astype(compute_dtype)          # (tile_b, D_in)
        li = 0
        for ci, acts in enumerate(chain_acts):
            acc = None
            for act in acts:
                w_ref = wb[2 * li]
                b_ref = wb[2 * li + 1]
                # MXU matmul with f32 accumulation; bias/activation epilogue in f32.
                acc = jnp.dot(h, w_ref[...], preferred_element_type=jnp.float32)
                acc = acc + b_ref[...]                # (tile_b, H_pad) + (1, H_pad)
                if act == "relu":
                    acc = jnp.maximum(acc, 0.0)
                elif act == "sigmoid":
                    acc = jax.nn.sigmoid(acc)
                elif act != "none":
                    raise ValueError(f"unknown activation {act!r}")
                h = acc.astype(compute_dtype)         # feed next matmul (DCE'd if unused)
                li += 1
            outs[ci][...] = acc.astype(outs[ci].dtype)

    return kernel


# ----------------------------------------------------------------------------- wrapper
def fused_chained_mlp(x, prepared, *, tile_b=None):
    """Run one or more fused Linear/activation chains as a single pallas_call.

    x:        (B, D_in) — passed as-is (no padding / casting copies in HBM).
    prepared: dict from prepare_contrastive_params(): pre-padded weights/biases.
    Returns one lane-padded (B, out_pad) f32 array per chain.
    """
    B, D_in = x.shape
    compute_dtype = prepared["compute_dtype"]
    chains = prepared["chains"]

    wb = []
    for c in chains:
        for w, b in zip(c["w"], c["b"]):
            wb += [w, b]
    assert int(wb[0].shape[0]) == D_in, "input width must match first (unpadded) weight in-dim"
    out_pads = [int(c["w"][-1].shape[1]) for c in chains]

    # ---- batch tiling: full batch if it fits, else sublane-packed tiles + partial last block
    sub = {4: 8, 2: 16, 1: 32}.get(jnp.dtype(x.dtype).itemsize, 8)
    if jnp.dtype(compute_dtype).itemsize == 2:
        sub = max(sub, 16)                            # bf16 vregs are (16, 128)
    tile_b = 256 if tile_b is None else int(tile_b)   # fills MXU M on v5e/v6e/v7x
    if tile_b >= B:
        tile_b = B                                    # single block == full dim: always legal
    else:
        tile_b = max(sub, (tile_b // sub) * sub)
    grid = (pl.cdiv(B, tile_b),)                      # partial last block handled by Pallas

    in_specs = [pl.BlockSpec((tile_b, D_in), lambda i: (i, 0))]
    for arr in wb:
        # Grid-invariant (resident) weights/biases: constant index_map, no re-fetch.
        # TODO(synk): pipeline_mode=pl.Buffered(1) on these resident specs would drop
        # the second VMEM copy of the weights (matters on v7x's 64 MiB) — left off to
        # keep lowering conservative.
        in_specs.append(pl.BlockSpec(tuple(int(d) for d in arr.shape), lambda i: (0, 0)))
    out_specs = tuple(pl.BlockSpec((tile_b, p), lambda i: (i, 0)) for p in out_pads)
    out_shape = tuple(jax.ShapeDtypeStruct((B, p), jnp.float32) for p in out_pads)

    # ---- explicit VMEM budget: double-buffered IO + resident weights + activation slack
    w_bytes = sum(int(a.size) * a.dtype.itemsize for a in wb)
    io_bytes = tile_b * D_in * jnp.dtype(x.dtype).itemsize + sum(tile_b * p * 4 for p in out_pads)
    widths = [D_in] + [int(a.shape[1]) for a in wb[0::2]]
    act_bytes = tile_b * max(widths) * 4 * 4
    est = 2 * (w_bytes + io_bytes) + act_bytes
    vmem_limit = int(min(max(est, 32 << 20), _vmem_cap_bytes()))

    outs = pl.pallas_call(
        _make_chained_mlp_kernel([c["acts"] for c in chains], compute_dtype),
        out_shape=out_shape,
        grid_spec=pltpu.PrefetchScalarGridSpec(
            num_scalar_prefetch=0,
            grid=grid,
            in_specs=in_specs,
            out_specs=out_specs,
        ),
        compiler_params=pltpu.CompilerParams(
            dimension_semantics=("parallel",),
            vmem_limit_bytes=vmem_limit,
        ),
    )(x, *wb)
    return list(outs)


# ----------------------------------------------------------------------------- params
def _init_linear(key, in_dim, out_dim, dtype=jnp.float32):
    """PyTorch-style uniform fan-in init; W stored as (in, out)."""
    kw, kb = jax.random.split(key)
    bound = 1.0 / math.sqrt(in_dim)
    w = jax.random.uniform(kw, (in_dim, out_dim), dtype, -bound, bound)
    b = jax.random.uniform(kb, (out_dim,), dtype, -bound, bound)
    return w, b


def init_contrastive_params(key, input_dim,
                            encoder_layers=(1000, 500, 100, 10),
                            proj_layers=(256, 128, 10),
                            decoder_layers=(10, 2000, 500, 500, 784),
                            dtype=jnp.float32):
    def make_chain(key, dims, acts):
        ws, bs = [], []
        for i in range(len(dims) - 1):
            key, sub = jax.random.split(key)
            w, b = _init_linear(sub, dims[i], dims[i + 1], dtype)
            ws.append(w)
            bs.append(b)
        return key, {"w": ws, "b": bs, "acts": list(acts)}

    # Encoder (+ fused latent1): ReLU on every layer except the last; latent1 has no act.
    enc_dims = [input_dim] + list(encoder_layers) + [encoder_layers[-1]]
    enc_acts = ["relu"] * (len(encoder_layers) - 1) + ["none", "none"]
    # Projector (+ fused latent3): same pattern.
    proj_dims = [2 * encoder_layers[-1]] + list(proj_layers) + [proj_layers[-1]]
    proj_acts = ["relu"] * (len(proj_layers) - 1) + ["none", "none"]
    # Decoder: ReLU on every layer except the last, which is Sigmoid.
    dec_dims = [proj_layers[-1]] + list(decoder_layers)
    dec_acts = ["relu"] * (len(decoder_layers) - 1) + ["sigmoid"]

    key, enc = make_chain(key, enc_dims, enc_acts)
    key, proj = make_chain(key, proj_dims, proj_acts)
    key, dec = make_chain(key, dec_dims, dec_acts)
    return {"encoder": enc, "projector": proj, "decoder": dec}


def _pad_chain(ws, bs, first_in_dim, compute_dtype):
    """Pad out-dims to 128 lanes (zero cols/rows, zero bias) and cast once."""
    pws, pbs = [], []
    in_dim = int(first_in_dim)
    for w, b in zip(ws, bs):
        ti, to = int(w.shape[0]), int(w.shape[1])
        op = _round_up(to, 128)
        wp = jnp.zeros((in_dim, op), compute_dtype).at[:ti, :to].set(w.astype(compute_dtype))
        bp = jnp.zeros((1, op), jnp.float32).at[:, :to].set(
            b.reshape(1, -1).astype(jnp.float32))
        pws.append(wp)
        pbs.append(bp)
        in_dim = op
    return pws, pbs, in_dim


def prepare_contrastive_params(params, compute_dtype=jnp.float32):
    """Pad/cast weights ONCE (not per forward call).

    Zero-padded cols/rows and zero bias keep padded lanes exactly zero through every
    Linear / ReLU / identity layer, so slicing kernel outputs to the true widths is
    exact.  (Sigmoid makes padded lanes 0.5 in `recon`, which is sliced away.)
    """
    enc, proj, dec = params["encoder"], params["projector"], params["decoder"]

    enc_w, enc_b, _ = _pad_chain(enc["w"], enc["b"], enc["w"][0].shape[0], compute_dtype)
    proj_w, proj_b, proj_pad = _pad_chain(proj["w"], proj["b"], proj["w"][0].shape[0], compute_dtype)
    # The decoder's first in-dim matches the *padded* latent fed forward inside the
    # fused projector+decoder kernel (padded latent lanes are exactly zero).
    dec_w, dec_b, _ = _pad_chain(dec["w"], dec["b"], proj_pad, compute_dtype)

    return {
        "encoder": {
            "compute_dtype": compute_dtype,
            "chains": [{"w": enc_w, "b": enc_b, "acts": list(enc["acts"]),
                        "out_dim": int(enc["w"][-1].shape[1])}],
        },
        "proj_dec": {
            "compute_dtype": compute_dtype,
            "chains": [
                {"w": proj_w, "b": proj_b, "acts": list(proj["acts"]),
                 "out_dim": int(proj["w"][-1].shape[1])},
                {"w": dec_w, "b": dec_b, "acts": list(dec["acts"]),
                 "out_dim": int(dec["w"][-1].shape[1])},
            ],
        },
    }


# ----------------------------------------------------------------------------- forward
def contrastive_forward(weakx, strongx, prepared, *, tile_b=None):
    B = weakx.shape[0]
    enc_dim = prepared["encoder"]["chains"][0]["out_dim"]

    # One encoder launch over both views (2B rows): halves launches + weight DMA and
    # doubles the batch grid for pipelining / v7x megacore sharding.
    x2 = jnp.concatenate([weakx, strongx], axis=0)
    (enc_out,) = fused_chained_mlp(x2, prepared["encoder"], tile_b=tile_b)
    enc_out = enc_out[:, :enc_dim]
    weak_z, strong_z = enc_out[:B], enc_out[B:]

    # torch.cat(dim=1) — tiny XLA concat between the two kernel calls.
    z = jnp.concatenate([weak_z, strong_z], axis=1)

    # Projector(+latent3) and Decoder fused into one call with two outputs.
    latent_p, recon_p = fused_chained_mlp(z, prepared["proj_dec"], tile_b=tile_b)
    proj_c, dec_c = prepared["proj_dec"]["chains"]
    latent = latent_p[:, :proj_c["out_dim"]]
    recon = recon_p[:, :dec_c["out_dim"]]
    return weak_z, strong_z, latent, recon


# ----------------------------------------------------------------------------- reference
def _ref_chain(x, p):
    h = x
    for w, b, act in zip(p["w"], p["b"], p["acts"]):
        h = h @ w + b
        if act == "relu":
            h = jnp.maximum(h, 0.0)
        elif act == "sigmoid":
            h = jax.nn.sigmoid(h)
    return h


def reference_forward(weakx, strongx, params):
    weak_z = _ref_chain(weakx, params["encoder"])
    strong_z = _ref_chain(strongx, params["encoder"])
    z = jnp.concatenate([weak_z, strong_z], axis=1)
    latent = _ref_chain(z, params["projector"])
    recon = _ref_chain(latent, params["decoder"])
    return weak_z, strong_z, latent, recon


# ----------------------------------------------------------------------------- demo
if __name__ == "__main__":
    key = jax.random.PRNGKey(0)

    # Small shapes, same structure as the module defaults.
    B = 32
    input_dim = 48
    encoder_layers = (64, 32, 16, 8)
    proj_layers = (32, 16, 8)
    decoder_layers = (8, 64, 48)

    key, k1, k2, kp = jax.random.split(key, 4)
    weakx = jax.random.normal(k1, (B, input_dim), jnp.float32)
    strongx = jax.random.normal(k2, (B, input_dim), jnp.float32)
    params = init_contrastive_params(kp, input_dim, encoder_layers,
                                     proj_layers, decoder_layers)
    refs = reference_forward(weakx, strongx, params)

    # f32 operand path.
    prep_f32 = prepare_contrastive_params(params, jnp.float32)
    outs = contrastive_forward(weakx, strongx, prep_f32)
    outs = jax.block_until_ready(outs)
    assert outs[0].shape == (B, encoder_layers[-1])
    assert outs[1].shape == (B, encoder_layers[-1])
    assert outs[2].shape == (B, proj_layers[-1])
    assert outs[3].shape == (B, decoder_layers[-1])
    for o, r in zip(outs, refs):
        assert jnp.allclose(o, r, atol=1e-5, rtol=1e-5), float(jnp.max(jnp.abs(o - r)))

    # bf16 operand path (f32 accumulation + f32 epilogue) — recommended on v6e/v7x:
    # halves weight/activation HBM bytes and doubles MXU rate; relaxed tolerance.
    prep_bf16 = prepare_contrastive_params(params, jnp.bfloat16)
    outs_bf16 = contrastive_forward(weakx, strongx, prep_bf16)
    outs_bf16 = jax.block_until_ready(outs_bf16)
    for o, r in zip(outs_bf16, refs):
        assert jnp.allclose(o, r, atol=1e-1, rtol=1e-1)

    print("KERNEL_OK")
</pallas_src>

<mosaic_0001>
module attributes {stable_mosaic.version = 11 : i64} {
  func.func @kernel(%arg0: i32, %arg1: memref<64x48xf32, #tpu.memory_space<vmem>>, %arg2: memref<48x128xf32, #tpu.memory_space<vmem>>, %arg3: memref<1x128xf32, #tpu.memory_space<vmem>>, %arg4: memref<128x128xf32, #tpu.memory_space<vmem>>, %arg5: memref<1x128xf32, #tpu.memory_space<vmem>>, %arg6: memref<128x128xf32, #tpu.memory_space<vmem>>, %arg7: memref<1x128xf32, #tpu.memory_space<vmem>>, %arg8: memref<128x128xf32, #tpu.memory_space<vmem>>, %arg9: memref<1x128xf32, #tpu.memory_space<vmem>>, %arg10: memref<128x128xf32, #tpu.memory_space<vmem>>, %arg11: memref<1x128xf32, #tpu.memory_space<vmem>>, %arg12: memref<64x128xf32, #tpu.memory_space<vmem>>) attributes {dimension_semantics = [#tpu.dimension_semantics<parallel>], iteration_bounds = array<i64: 1>, scalar_prefetch = 0 : i64, scratch_operands = 0 : i64, tpu.core_type = #tpu.core_type<tc>, window_params = [{transform_indices = @transform_0, window_bounds = array<i64: 64, 48>}, {pipeline_mode = #tpu.pipeline_mode<synchronous>, transform_indices = @transform_1, window_bounds = array<i64: 48, 128>}, {pipeline_mode = #tpu.pipeline_mode<synchronous>, transform_indices = @transform_2, window_bounds = array<i64: 1, 128>}, {pipeline_mode = #tpu.pipeline_mode<synchronous>, transform_indices = @transform_3, window_bounds = array<i64: 128, 128>}, {pipeline_mode = #tpu.pipeline_mode<synchronous>, transform_indices = @transform_4, window_bounds = array<i64: 1, 128>}, {pipeline_mode = #tpu.pipeline_mode<synchronous>, transform_indices = @transform_5, window_bounds = array<i64: 128, 128>}, {pipeline_mode = #tpu.pipeline_mode<synchronous>, transform_indices = @transform_6, window_bounds = array<i64: 1, 128>}, {pipeline_mode = #tpu.pipeline_mode<synchronous>, transform_indices = @transform_7, window_bounds = array<i64: 128, 128>}, {pipeline_mode = #tpu.pipeline_mode<synchronous>, transform_indices = @transform_8, window_bounds = array<i64: 1, 128>}, {pipeline_mode = #tpu.pipeline_mode<synchronous>, transform_indices = @transform_9, window_bounds = array<i64: 128, 128>}, {pipeline_mode = #tpu.pipeline_mode<synchronous>, transform_indices = @transform_10, window_bounds = array<i64: 1, 128>}, {transform_indices = @transform_11, window_bounds = array<i64: 64, 128>}]} {
    %c0 = arith.constant 0 : index
    %c0_0 = arith.constant 0 : index
    %0 = vector.load %arg1[%c0, %c0_0] : memref<64x48xf32, #tpu.memory_space<vmem>>, vector<64x48xf32>
    %c0_1 = arith.constant 0 : index
    %c0_2 = arith.constant 0 : index
    %1 = vector.load %arg2[%c0_1, %c0_2] : memref<48x128xf32, #tpu.memory_space<vmem>>, vector<48x128xf32>
    %cst = arith.constant dense<0.000000e+00> : vector<64x128xf32>
    %2 = tpu.matmul %0, %1, %cst {dimension_numbers = #tpu.dot_dimension_numbers<[1], [0], [0], [1], [0, 0, 1, 1], [], []>} : vector<64x48xf32>, vector<48x128xf32>, vector<64x128xf32> -> vector<64x128xf32>
    %c0_3 = arith.constant 0 : index
    %c0_4 = arith.constant 0 : index
    %3 = vector.load %arg3[%c0_3, %c0_4] : memref<1x128xf32, #tpu.memory_space<vmem>>, vector<1x128xf32>
    %4 = vector.broadcast %3 : vector<1x128xf32> to vector<64x128xf32>
    %5 = arith.addf %2, %4 : vector<64x128xf32>
    %cst_5 = arith.constant 0.000000e+00 : f32
    %6 = vector.broadcast %cst_5 : f32 to vector<64x128xf32>
    %7 = arith.maximumf %5, %6 : vector<64x128xf32>
    %c0_6 = arith.constant 0 : index
    %c0_7 = arith.constant 0 : index
    %8 = vector.load %arg4[%c0_6, %c0_7] : memref<128x128xf32, #tpu.memory_space<vmem>>, vector<128x128xf32>
    %cst_8 = arith.constant dense<0.000000e+00> : vector<64x128xf32>
    %9 = tpu.matmul %7, %8, %cst_8 {dimension_numbers = #tpu.dot_dimension_numbers<[1], [0], [0], [1], [0, 0, 1, 1], [], []>} : vector<64x128xf32>, vector<128x128xf32>, vector<64x128xf32> -> vector<64x128xf32>
    %c0_9 = arith.constant 0 : index
    %c0_10 = arith.constant 0 : index
    %10 = vector.load %arg5[%c0_9, %c0_10] : memref<1x128xf32, #tpu.memory_space<vmem>>, vector<1x128xf32>
    %11 = vector.broadcast %10 : vector<1x128xf32> to vector<64x128xf32>
    %12 = arith.addf %9, %11 : vector<64x128xf32>
    %cst_11 = arith.constant 0.000000e+00 : f32
    %13 = vector.broadcast %cst_11 : f32 to vector<64x128xf32>
    %14 = arith.maximumf %12, %13 : vector<64x128xf32>
    %c0_12 = arith.constant 0 : index
    %c0_13 = arith.constant 0 : index
    %15 = vector.load %arg6[%c0_12, %c0_13] : memref<128x128xf32, #tpu.memory_space<vmem>>, vector<128x128xf32>
    %cst_14 = arith.constant dense<0.000000e+00> : vector<64x128xf32>
    %16 = tpu.matmul %14, %15, %cst_14 {dimension_numbers = #tpu.dot_dimension_numbers<[1], [0], [0], [1], [0, 0, 1, 1], [], []>} : vector<64x128xf32>, vector<128x128xf32>, vector<64x128xf32> -> vector<64x128xf32>
    %c0_15 = arith.constant 0 : index
    %c0_16 = arith.constant 0 : index
    %17 = vector.load %arg7[%c0_15, %c0_16] : memref<1x128xf32, #tpu.memory_space<vmem>>, vector<1x128xf32>
    %18 = vector.broadcast %17 : vector<1x128xf32> to vector<64x128xf32>
    %19 = arith.addf %16, %18 : vector<64x128xf32>
    %cst_17 = arith.constant 0.000000e+00 : f32
    %20 = vector.broadcast %cst_17 : f32 to vector<64x128xf32>
    %21 = arith.maximumf %19, %20 : vector<64x128xf32>
    %c0_18 = arith.constant 0 : index
    %c0_19 = arith.constant 0 : index
    %22 = vector.load %arg8[%c0_18, %c0_19] : memref<128x128xf32, #tpu.memory_space<vmem>>, vector<128x128xf32>
    %cst_20 = arith.constant dense<0.000000e+00> : vector<64x128xf32>
    %23 = tpu.matmul %21, %22, %cst_20 {dimension_numbers = #tpu.dot_dimension_numbers<[1], [0], [0], [1], [0, 0, 1, 1], [], []>} : vector<64x128xf32>, vector<128x128xf32>, vector<64x128xf32> -> vector<64x128xf32>
    %c0_21 = arith.constant 0 : index
    %c0_22 = arith.constant 0 : index
    %24 = vector.load %arg9[%c0_21, %c0_22] : memref<1x128xf32, #tpu.memory_space<vmem>>, vector<1x128xf32>
    %25 = vector.broadcast %24 : vector<1x128xf32> to vector<64x128xf32>
    %26 = arith.addf %23, %25 : vector<64x128xf32>
    %c0_23 = arith.constant 0 : index
    %c0_24 = arith.constant 0 : index
    %27 = vector.load %arg10[%c0_23, %c0_24] : memref<128x128xf32, #tpu.memory_space<vmem>>, vector<128x128xf32>
    %cst_25 = arith.constant dense<0.000000e+00> : vector<64x128xf32>
    %28 = tpu.matmul %26, %27, %cst_25 {dimension_numbers = #tpu.dot_dimension_numbers<[1], [0], [0], [1], [0, 0, 1, 1], [], []>} : vector<64x128xf32>, vector<128x128xf32>, vector<64x128xf32> -> vector<64x128xf32>
    %c0_26 = arith.constant 0 : index
    %c0_27 = arith.constant 0 : index
    %29 = vector.load %arg11[%c0_26, %c0_27] : memref<1x128xf32, #tpu.memory_space<vmem>>, vector<1x128xf32>
    %30 = vector.broadcast %29 : vector<1x128xf32> to vector<64x128xf32>
    %31 = arith.addf %28, %30 : vector<64x128xf32>
    %c0_28 = arith.constant 0 : index
    %c0_29 = arith.constant 0 : index
    %32 = vector.load %arg12[%c0_28, %c0_29] : memref<64x128xf32, #tpu.memory_space<vmem>>, vector<64x128xf32>
    tpu.vector_store %arg12[%c0_28, %c0_29], %31 {strides = array<i32>} : memref<64x128xf32, #tpu.memory_space<vmem>>, vector<64x128xf32>,
    return
  }
  func.func @transform_0(%arg0: i32) -> (i32, i32) {
    %c0_i32 = arith.constant 0 : i32
    %c0_i32_0 = arith.constant 0 : i32
    return %arg0, %c0_i32 : i32, i32
  }
  func.func @transform_1(%arg0: i32) -> (i32, i32) {
    %c0_i32 = arith.constant 0 : i32
    %c0_i32_0 = arith.constant 0 : i32
    %c0_i32_1 = arith.constant 0 : i32
    return %c0_i32, %c0_i32_0 : i32, i32
  }
  func.func @transform_2(%arg0: i32) -> (i32, i32) {
    %c0_i32 = arith.constant 0 : i32
    %c0_i32_0 = arith.constant 0 : i32
    %c0_i32_1 = arith.constant 0 : i32
    return %c0_i32, %c0_i32_0 : i32, i32
  }
  func.func @transform_3(%arg0: i32) -> (i32, i32) {
    %c0_i32 = arith.constant 0 : i32
    %c0_i32_0 = arith.constant 0 : i32
    %c0_i32_1 = arith.constant 0 : i32
    return %c0_i32, %c0_i32_0 : i32, i32
  }
  func.func @transform_4(%arg0: i32) -> (i32, i32) {
    %c0_i32 = arith.constant 0 : i32
    %c0_i32_0 = arith.constant 0 : i32
    %c0_i32_1 = arith.constant 0 : i32
    return %c0_i32, %c0_i32_0 : i32, i32
  }
  func.func @transform_5(%arg0: i32) -> (i32, i32) {
    %c0_i32 = arith.constant 0 : i32
    %c0_i32_0 = arith.constant 0 : i32
    %c0_i32_1 = arith.constant 0 : i32
    return %c0_i32, %c0_i32_0 : i32, i32
  }
  func.func @transform_6(%arg0: i32) -> (i32, i32) {
    %c0_i32 = arith.constant 0 : i32
    %c0_i32_0 = arith.constant 0 : i32
    %c0_i32_1 = arith.constant 0 : i32
    return %c0_i32, %c0_i32_0 : i32, i32
  }
  func.func @transform_7(%arg0: i32) -> (i32, i32) {
    %c0_i32 = arith.constant 0 : i32
    %c0_i32_0 = arith.constant 0 : i32
    %c0_i32_1 = arith.constant 0 : i32
    return %c0_i32, %c0_i32_0 : i32, i32
  }
  func.func @transform_8(%arg0: i32) -> (i32, i32) {
    %c0_i32 = arith.constant 0 : i32
    %c0_i32_0 = arith.constant 0 : i32
    %c0_i32_1 = arith.constant 0 : i32
    return %c0_i32, %c0_i32_0 : i32, i32
  }
  func.func @transform_9(%arg0: i32) -> (i32, i32) {
    %c0_i32 = arith.constant 0 : i32
    %c0_i32_0 = arith.constant 0 : i32
    %c0_i32_1 = arith.constant 0 : i32
    return %c0_i32, %c0_i32_0 : i32, i32
  }
  func.func @transform_10(%arg0: i32) -> (i32, i32) {
    %c0_i32 = arith.constant 0 : i32
    %c0_i32_0 = arith.constant 0 : i32
    %c0_i32_1 = arith.constant 0 : i32
    return %c0_i32, %c0_i32_0 : i32, i32
  }
  func.func @transform_11(%arg0: i32) -> (i32, i32) {
    %c0_i32 = arith.constant 0 : i32
    %c0_i32_0 = arith.constant 0 : i32
    return %arg0, %c0_i32 : i32, i32
  }
}

</mosaic_0001>

<llo_original>
// kernel: tpu_custom_call.1
$region0: #{tpu_custom_call.1}
  #allocation0 [shape = 'u32[]', space=smem, size = 0x4, offset = 0x4, fixed_abs, tag = 'smem constant byte address 0x4 - core index']
  #allocation1 [shape = 'u32[144,128]{1,0:T(1,128)}', space=vmem, size = 0x12000, scoped, tag = 'internal scratch']
  %s0 = inlined_call_operand.vmem [shape: f32[64,48], index: 0, kind: input, shape index: {}]
  %s1 = inlined_call_operand.hbm [shape: f32[48,128], index: 1, kind: input, shape index: {}]
  %s2 = inlined_call_operand.vmem [shape: f32[1,128], index: 2, kind: input, shape index: {}]
  %s3 = inlined_call_operand.hbm [shape: f32[128,128], index: 3, kind: input, shape index: {}]
  %s4 = inlined_call_operand.vmem [shape: f32[1,128], index: 4, kind: input, shape index: {}]
  %s5 = inlined_call_operand.vmem [shape: f32[128,128], index: 5, kind: input, shape index: {}]
  %s6 = inlined_call_operand.vmem [shape: f32[1,128], index: 6, kind: input, shape index: {}]
  %s7 = inlined_call_operand.hbm [shape: f32[128,128], index: 7, kind: input, shape index: {}]
  %s8 = inlined_call_operand.vmem [shape: f32[1,128], index: 8, kind: input, shape index: {}]
  %s9 = inlined_call_operand.hbm [shape: f32[128,128], index: 9, kind: input, shape index: {}]
  %s10 = inlined_call_operand.vmem [shape: f32[1,128], index: 10, kind: input, shape index: {}]
  %s11 = inlined_call_operand.hbm [shape: f32[64,128], index: 11, kind: output, shape index: {}]
  %s12 = sld [smem:[#allocation0]]
  $region70: #{tpu_custom_call.1} parent=0
    _
  %s14 = ssub.s32 1, %s12
  %s15 = scalar_select 0, %s14, %s12
  $region1: #{tpu_custom_call.1} parent=0
    #allocation2 [shape = 'u8[24576]{0}', space=vmem, size = 0x6000, scoped, tag = 'input window, operand 1, single buffered']
    #allocation3 [shape = 's32[1]{0}', space=sflag, size = 0x4, scoped, tag = 'scoped memory for tpu_custom_call.1']
    #allocation4 [shape = 's32[1]{0}', space=sflag, size = 0x4, scoped, tag = 'scoped memory for tpu_custom_call.1']
    #allocation5 [shape = 'u8[65536]{0}', space=vmem, size = 0x10000, scoped, tag = 'input window, operand 3, single buffered']
    #allocation6 [shape = 's32[1]{0}', space=sflag, size = 0x4, scoped, tag = 'scoped memory for tpu_custom_call.1']
    #allocation7 [shape = 'u8[65536]{0}', space=vmem, size = 0x10000, scoped, tag = 'input window, operand 7, single buffered']
    #allocation8 [shape = 'u8[65536]{0}', space=vmem, size = 0x10000, scoped, tag = 'input window, operand 9, single buffered']
    #allocation9 [shape = 's32[1]{0}', space=sflag, size = 0x4, scoped, tag = 'scoped memory for tpu_custom_call.1']
    #allocation10 [shape = 'u8[32768]{0}', space=vmem, size = 0x8000, scoped, tag = 'output window, operand 0, single buffered']
    %16 = vsyncpa [#allocation3], 0
    %17 = vsyncpa [#allocation6], 0
    %18 = vsyncpa [#allocation9], 0
    %19 = vsyncpa [#allocation4], 0
    // Predicated region
    $region2: #{tpu_custom_call.1} parent=1 // pred_check
      _
    $region3: #{tpu_custom_call.1} parent=1 // pred_check_branch
      %21 = sbr.rel (0) target = $region5
    $region4: #{tpu_custom_call.1} parent=1 // pred_region
      _
    $region5: #{tpu_custom_call.1} parent=1 // pred_fallthru
      _
    // Predicated region
    $region6: #{tpu_custom_call.1} parent=1 // pred_check
      _
    $region7: #{tpu_custom_call.1} parent=1 // pred_check_branch
      %23 = sbr.rel (0) target = $region9
    $region8: #{tpu_custom_call.1} parent=1 // pred_region
      %s25 = ssub.s32 768, 768
      %26 = vsyncadd [#allocation3], %s25
      %s27 = sshll.u32 [#allocation2], 4
      %s28 = int_to_ptr.vmem [resolvable:$true] %s27
      %33 = dma.hbm_to_vmem [thread:$0]  %s1, 768, %s28, [#allocation3], 128, 128, 8
    $region9: #{tpu_custom_call.1} parent=1 // pred_fallthru
      _
    // Predicated region
    $region10: #{tpu_custom_call.1} parent=1 // pred_check
      _
    $region11: #{tpu_custom_call.1} parent=1 // pred_check_branch
      %35 = sbr.rel (0) target = $region13
    $region12: #{tpu_custom_call.1} parent=1 // pred_region
      _
    $region13: #{tpu_custom_call.1} parent=1 // pred_fallthru
      _
    // Predicated region
    $region14: #{tpu_custom_call.1} parent=1 // pred_check
      _
    $region15: #{tpu_custom_call.1} parent=1 // pred_check_branch
      %37 = sbr.rel (0) target = $region17
    $region16: #{tpu_custom_call.1} parent=1 // pred_region
      %s39 = ssub.s32 2048, 2048
      %40 = vsyncadd [#allocation6], %s39
      %s41 = sshll.u32 [#allocation5], 4
      %s42 = int_to_ptr.vmem [resolvable:$true] %s41
      %47 = dma.hbm_to_vmem [thread:$0]  %s3, 2048, %s42, [#allocation6], 128, 128, 8
    $region17: #{tpu_custom_call.1} parent=1 // pred_fallthru
      _
    // Predicated region
    $region18: #{tpu_custom_call.1} parent=1 // pred_check
      _
    $region19: #{tpu_custom_call.1} parent=1 // pred_check_branch
      %49 = sbr.rel (0) target = $region21
    $region20: #{tpu_custom_call.1} parent=1 // pred_region
      _
    $region21: #{tpu_custom_call.1} parent=1 // pred_fallthru
      _
    // Predicated region
    $region22: #{tpu_custom_call.1} parent=1 // pred_check
      _
    $region23: #{tpu_custom_call.1} parent=1 // pred_check_branch
      %51 = sbr.rel (0) target = $region25
    $region24: #{tpu_custom_call.1} parent=1 // pred_region
      _
    $region25: #{tpu_custom_call.1} parent=1 // pred_fallthru
      _
    // Predicated region
    $region26: #{tpu_custom_call.1} parent=1 // pred_check
      _
    $region27: #{tpu_custom_call.1} parent=1 // pred_check_branch
      %53 = sbr.rel (0) target = $region29
    $region28: #{tpu_custom_call.1} parent=1 // pred_region
      _
    $region29: #{tpu_custom_call.1} parent=1 // pred_fallthru
      _
    // Predicated region
    $region30: #{tpu_custom_call.1} parent=1 // pred_check
      _
    $region31: #{tpu_custom_call.1} parent=1 // pred_check_branch
      %55 = sbr.rel (0) target = $region33
    $region32: #{tpu_custom_call.1} parent=1 // pred_region
      %s57 = ssub.s32 2048, 2048
      %58 = vsyncadd [#allocation6], %s57
      %s59 = sshll.u32 [#allocation7], 4
      %s60 = int_to_ptr.vmem [resolvable:$true] %s59
      %65 = dma.hbm_to_vmem [thread:$0]  %s7, 2048, %s60, [#allocation6], 128, 128, 8
    $region33: #{tpu_custom_call.1} parent=1 // pred_fallthru
      _
    // Predicated region
    $region34: #{tpu_custom_call.1} parent=1 // pred_check
      _
    $region35: #{tpu_custom_call.1} parent=1 // pred_check_branch
      %67 = sbr.rel (0) target = $region37
    $region36: #{tpu_custom_call.1} parent=1 // pred_region
      _
    $region37: #{tpu_custom_call.1} parent=1 // pred_fallthru
      _
    // Predicated region
    $region38: #{tpu_custom_call.1} parent=1 // pred_check
      _
    $region39: #{tpu_custom_call.1} parent=1 // pred_check_branch
      %69 = sbr.rel (0) target = $region41
    $region40: #{tpu_custom_call.1} parent=1 // pred_region
      %s71 = ssub.s32 2048, 2048
      %72 = vsyncadd [#allocation9], %s71
      %s73 = sshll.u32 [#allocation8], 4
      %s74 = int_to_ptr.vmem [resolvable:$true] %s73
      %79 = dma.hbm_to_vmem [thread:$0]  %s9, 2048, %s74, [#allocation9], 128, 128, 8
    $region41: #{tpu_custom_call.1} parent=1 // pred_fallthru
      _
    // Predicated region
    $region42: #{tpu_custom_call.1} parent=1 // pred_check
      _
    $region43: #{tpu_custom_call.1} parent=1 // pred_check_branch
      %81 = sbr.rel (0) target = $region45
    $region44: #{tpu_custom_call.1} parent=1 // pred_region
      _
    $region45: #{tpu_custom_call.1} parent=1 // pred_fallthru
      _
    // Predicated region
    $region46: #{tpu_custom_call.1} parent=1 // pred_check
      _
    $region47: #{tpu_custom_call.1} parent=1 // pred_check_branch
      %83 = sbr.rel (0) target = $region49
    $region48: #{tpu_custom_call.1} parent=1 // pred_region
      %84 = dma.done [#allocation3], 768
    $region49: #{tpu_custom_call.1} parent=1 // pred_fallthru
      _
    // Predicated region
    $region50: #{tpu_custom_call.1} parent=1 // pred_check
      _
    $region51: #{tpu_custom_call.1} parent=1 // pred_check_branch
      %86 = sbr.rel (0) target = $region53
    $region52: #{tpu_custom_call.1} parent=1 // pred_region
      %87 = dma.done [#allocation6], 2048
    $region53: #{tpu_custom_call.1} parent=1 // pred_fallthru
      _
    // Predicated region
    $region54: #{tpu_custom_call.1} parent=1 // pred_check
      _
    $region55: #{tpu_custom_call.1} parent=1 // pred_check_branch
      %89 = sbr.rel (0) target = $region57
    $region56: #{tpu_custom_call.1} parent=1 // pred_region
      %90 = dma.done [#allocation6], 2048
    $region57: #{tpu_custom_call.1} parent=1 // pred_fallthru
      _
    // Predicated region
    $region58: #{tpu_custom_call.1} parent=1 // pred_check
      _
    $region59: #{tpu_custom_call.1} parent=1 // pred_check_branch
      %92 = sbr.rel (0) target = $region61
    $region60: #{tpu_custom_call.1} parent=1 // pred_region
      %93 = dma.done [#allocation9], 2048
    $region61: #{tpu_custom_call.1} parent=1 // pred_fallthru
      _
    %v94 = vld [vmem:[%s0] sm:$0xff]
    %v95 = vld [vmem:[%s0 + $0x8] sm:$0xff]
    %v96 = vld [vmem:[%s0 + $0x10] sm:$0xff]
    %v97 = vld [vmem:[%s0 + $0x18] sm:$0xff]
    %v98 = vld [vmem:[%s0 + $0x20] sm:$0xff]
    %v99 = vld [vmem:[%s0 + $0x28] sm:$0xff]
    %v100 = vld [vmem:[%s0 + $0x30] sm:$0xff]
    %v101 = vld [vmem:[%s0 + $0x38] sm:$0xff]
    %v102 = vld [vmem:[#allocation2] sm:$0xff]
    %v103 = vld [vmem:[#allocation2 + $0x8] sm:$0xff]
    %v104 = vld [vmem:[#allocation2 + $0x10] sm:$0xff]
    %v105 = vld [vmem:[#allocation2 + $0x18] sm:$0xff]
    %v106 = vld [vmem:[#allocation2 + $0x20] sm:$0xff]
    %v107 = vld [vmem:[#allocation2 + $0x28] sm:$0xff]
    %v108 = vld [vmem:[%s2] sm:$0x1]
    %v110 = vlaneseq
    %v111 = vshrl.u32 %v110, 7
    %v112 = vsub.s32 0, %v111
    %v113 = vrot.slane %v108, %v112
    %vm115 = vcmask 392192
    %v117 = vsel %vm115, %v94, 0
    %v120 = vsel %vm115, %v95, 0
    %v123 = vsel %vm115, %v96, 0
    %v126 = vsel %vm115, %v97, 0
    %v129 = vsel %vm115, %v98, 0
    %v132 = vsel %vm115, %v99, 0
    %v135 = vsel %vm115, %v100, 0
    %v138 = vsel %vm115, %v101, 0
    %140 = vmatprep.subr.mxu0 0.0
    %141 = vmatpush1.msra.mxu0 %v102
    %142 = vmatprep.subr.mxu0 0.0
    %143 = vmatpush1.msra.mxu0 %v103
    %144 = vmatprep.subr.mxu0 0.0
    %145 = vmatpush1.msra.mxu0 %v104
    %146 = vmatprep.subr.mxu0 0.0
    %147 = vmatpush1.msra.mxu0 %v105
    %148 = vmatprep.subr.mxu0 0.0
    %149 = vmatpush1.msra.mxu0 %v106
    %150 = vmatprep.subr.mxu0 0.0
    %151 = vmatpush1.msra.mxu0 %v107
    %152 = vmatprep.subr.mxu0 0.0
    %153 = vmatpush1.msra.mxu0 0.0
    %154 = vmatprep.subr.mxu0 0.0
    %155 = vmatpush1.msra.mxu0 0.0
    %156 = vmatprep.subr.mxu0 0.0
    %157 = vmatpush1.msra.mxu0 0.0
    %158 = vmatprep.subr.mxu0 0.0
    %159 = vmatpush1.msra.mxu0 0.0
    %160 = vmatprep.subr.mxu0 0.0
    %161 = vmatpush1.msra.mxu0 0.0
    %162 = vmatprep.subr.mxu0 0.0
    %163 = vmatpush1.msra.mxu0 0.0
    %164 = vmatprep.subr.mxu0 0.0
    %165 = vmatpush1.msra.mxu0 0.0
    %166 = vmatprep.subr.mxu0 0.0
    %167 = vmatpush1.msra.mxu0 0.0
    %168 = vmatprep.subr.mxu0 0.0
    %169 = vmatpush1.msra.mxu0 0.0
    %170 = vmatprep.subr.mxu0 0.0
    %171 = vmatpush1.msra.mxu0 0.0
    %172 = vmatprep.subr.mxu0 0.0
    %173 = vmatpush1.msra.mxu0 0.0
    %174 = vmatprep.subr.mxu0 0.0
    %175 = vmatpush1.msra.mxu0 0.0
    %176 = vmatprep.subr.mxu0 0.0
    %177 = vmatpush1.msra.mxu0 0.0
    %178 = vmatprep.subr.mxu0 0.0
    %179 = vmatpush1.msra.mxu0 0.0
    %180 = vmatprep.subr.mxu0 0.0
    %181 = vmatpush1.msra.mxu0 0.0
    %182 = vmatprep.subr.mxu0 0.0
    %183 = vmatpush1.msra.mxu0 0.0
    %184 = vmatprep.subr.mxu0 0.0
    %185 = vmatpush1.msra.mxu0 0.0
    %186 = vmatprep.subr.mxu0 0.0
    %187 = vmatpush1.msra.mxu0 0.0
    %188 = vmatprep.subr.mxu0 0.0
    %189 = vmatpush1.msra.mxu0 0.0
    %190 = vmatprep.subr.mxu0 0.0
    %191 = vmatpush1.msra.mxu0 0.0
    %192 = vmatprep.subr.mxu0 0.0
    %193 = vmatpush1.msra.mxu0 0.0
    %194 = vmatprep.subr.mxu0 0.0
    %195 = vmatpush1.msra.mxu0 0.0
    %196 = vmatprep.subr.mxu0 0.0
    %197 = vmatpush1.msra.mxu0 0.0
    %198 = vmatprep.subr.mxu0 0.0
    %199 = vmatpush1.msra.mxu0 0.0
    %200 = vmatprep.subr.mxu0 0.0
    %201 = vmatpush1.msra.mxu0 0.0
    %202 = vmatprep.subr.mxu0 0.0
    %203 = vmatpush1.msra.mxu0 0.0
    %204 = vmatprep.mubr.f32.mxu0 0.0
    %205 = vmatmul.mubr.f32.gmra.mrb[0].mxu0 %v117
    %v206 = vpop.f32.mrb[0].mxu0
    %v207 = vadd.f32 %v113, %v206
    %v208 = vpop.f32.mrb[0].mxu0
    %209 = vmatprep.mubr.f32.mxu0 0.0
    %210 = vmatmul.mubr.f32.gmra.mrb[0].mxu0 %v120
    %v211 = vpop.f32.mrb[0].mxu0
    %v212 = vadd.f32 %v113, %v211
    %v213 = vpop.f32.mrb[0].mxu0
    %214 = vmatprep.mubr.f32.mxu0 0.0
    %215 = vmatmul.mubr.f32.gmra.mrb[0].mxu0 %v123
    %v216 = vpop.f32.mrb[0].mxu0
    %v217 = vadd.f32 %v113, %v216
    %v218 = vpop.f32.mrb[0].mxu0
    %219 = vmatprep.mubr.f32.mxu0 0.0
    %220 = vmatmul.mubr.f32.gmra.mrb[0].mxu0 %v126
    %v221 = vpop.f32.mrb[0].mxu0
    %v222 = vadd.f32 %v113, %v221
    %v223 = vpop.f32.mrb[0].mxu0
    %224 = vmatprep.mubr.f32.mxu0 0.0
    %225 = vmatmul.mubr.f32.gmra.mrb[0].mxu0 %v129
    %v226 = vpop.f32.mrb[0].mxu0
    %v227 = vadd.f32 %v113, %v226
    %v228 = vpop.f32.mrb[0].mxu0
    %229 = vmatprep.mubr.f32.mxu0 0.0
    %230 = vmatmul.mubr.f32.gmra.mrb[0].mxu0 %v132
    %v231 = vpop.f32.mrb[0].mxu0
    %v232 = vadd.f32 %v113, %v231
    %v233 = vpop.f32.mrb[0].mxu0
    %234 = vmatprep.mubr.f32.mxu0 0.0
    %235 = vmatmul.mubr.f32.gmra.mrb[0].mxu0 %v135
    %v236 = vpop.f32.mrb[0].mxu0
    %v237 = vadd.f32 %v113, %v236
    %v238 = vpop.f32.mrb[0].mxu0
    %239 = vmatprep.mubr.f32.mxu0 0.0
    %240 = vmatmul.mubr.f32.gmra.mrb[0].mxu0 %v138
    %v241 = vpop.f32.mrb[0].mxu0
    %v242 = vadd.f32 %v113, %v241
    %v243 = vpop.f32.mrb[0].mxu0
    %244 = vdwg.mxu0
    %v245 = vmax.f32 %v207, 0.0
    %v246 = vmax.f32 %v212, 0.0
    %v247 = vmax.f32 %v217, 0.0
    %v248 = vmax.f32 %v222, 0.0
    %v249 = vmax.f32 %v227, 0.0
    %v250 = vmax.f32 %v232, 0.0
    %v251 = vmax.f32 %v237, 0.0
    %v252 = vmax.f32 %v242, 0.0
    %v253 = vld [vmem:[#allocation5] sm:$0xff]
    %v254 = vld [vmem:[#allocation5 + $0x8] sm:$0xff]
    %v255 = vld [vmem:[#allocation5 + $0x10] sm:$0xff]
    %v256 = vld [vmem:[#allocation5 + $0x18] sm:$0xff]
    %v257 = vld [vmem:[#allocation5 + $0x20] sm:$0xff]
    %v258 = vld [vmem:[#allocation5 + $0x28] sm:$0xff]
    %v259 = vld [vmem:[#allocation5 + $0x30] sm:$0xff]
    %v260 = vld [vmem:[#allocation5 + $0x38] sm:$0xff]
    %v261 = vld [vmem:[#allocation5 + $0x40] sm:$0xff]
    %v262 = vld [vmem:[#allocation5 + $0x48] sm:$0xff]
    %v263 = vld [vmem:[#allocation5 + $0x50] sm:$0xff]
    %v264 = vld [vmem:[#allocation5 + $0x58] sm:$0xff]
    %v265 = vld [vmem:[#allocation5 + $0x60] sm:$0xff]
    %v266 = vld [vmem:[#allocation5 + $0x68] sm:$0xff]
    %v267 = vld [vmem:[#allocation5 + $0x70] sm:$0xff]
    %v268 = vld [vmem:[#allocation5 + $0x78] sm:$0xff]
    %v269 = vld [vmem:[%s4] sm:$0x1]
    %v271 = vlaneseq
    %v272 = vshrl.u32 %v271, 7
    %v273 = vsub.s32 0, %v272
    %v274 = vrot.slane %v269, %v273
    %276 = vmatprep.subr.mxu0 0.0
    %277 = vmatpush1.msra.mxu0 %v253
    %278 = vmatprep.subr.mxu0 0.0
    %279 = vmatpush1.msra.mxu0 %v254
    %280 = vmatprep.subr.mxu0 0.0
    %281 = vmatpush1.msra.mxu0 %v255
    %282 = vmatprep.subr.mxu0 0.0
    %283 = vmatpush1.msra.mxu0 %v256
    %284 = vmatprep.subr.mxu0 0.0
    %285 = vmatpush1.msra.mxu0 %v257
    %286 = vmatprep.subr.mxu0 0.0
    %287 = vmatpush1.msra.mxu0 %v258
    %288 = vmatprep.subr.mxu0 0.0
    %289 = vmatpush1.msra.mxu0 %v259
    %290 = vmatprep.subr.mxu0 0.0
    %291 = vmatpush1.msra.mxu0 %v260
    %292 = vmatprep.subr.mxu0 0.0
    %293 = vmatpush1.msra.mxu0 %v261
    %294 = vmatprep.subr.mxu0 0.0
    %295 = vmatpush1.msra.mxu0 %v262
    %296 = vmatprep.subr.mxu0 0.0
    %297 = vmatpush1.msra.mxu0 %v263
    %298 = vmatprep.subr.mxu0 0.0
    %299 = vmatpush1.msra.mxu0 %v264
    %300 = vmatprep.subr.mxu0 0.0
    %301 = vmatpush1.msra.mxu0 %v265
    %302 = vmatprep.subr.mxu0 0.0
    %303 = vmatpush1.msra.mxu0 %v266
    %304 = vmatprep.subr.mxu0 0.0
    %305 = vmatpush1.msra.mxu0 %v267
    %306 = vmatprep.subr.mxu0 0.0
    %307 = vmatpush1.msra.mxu0 %v268
    %308 = vmatprep.subr.mxu0 0.0
    %309 = vmatpush1.msra.mxu0 0.0
    %310 = vmatprep.subr.mxu0 0.0
    %311 = vmatpush1.msra.mxu0 0.0
    %312 = vmatprep.subr.mxu0 0.0
    %313 = vmatpush1.msra.mxu0 0.0
    %314 = vmatprep.subr.mxu0 0.0
    %315 = vmatpush1.msra.mxu0 0.0
    %316 = vmatprep.subr.mxu0 0.0
    %317 = vmatpush1.msra.mxu0 0.0
    %318 = vmatprep.subr.mxu0 0.0
    %319 = vmatpush1.msra.mxu0 0.0
    %320 = vmatprep.subr.mxu0 0.0
    %321 = vmatpush1.msra.mxu0 0.0
    %322 = vmatprep.subr.mxu0 0.0
    %323 = vmatpush1.msra.mxu0 0.0
    %324 = vmatprep.subr.mxu0 0.0
    %325 = vmatpush1.msra.mxu0 0.0
    %326 = vmatprep.subr.mxu0 0.0
    %327 = vmatpush1.msra.mxu0 0.0
    %328 = vmatprep.subr.mxu0 0.0
    %329 = vmatpush1.msra.mxu0 0.0
    %330 = vmatprep.subr.mxu0 0.0
    %331 = vmatpush1.msra.mxu0 0.0
    %332 = vmatprep.subr.mxu0 0.0
    %333 = vmatpush1.msra.mxu0 0.0
    %334 = vmatprep.subr.mxu0 0.0
    %335 = vmatpush1.msra.mxu0 0.0
    %336 = vmatprep.subr.mxu0 0.0
    %337 = vmatpush1.msra.mxu0 0.0
    %338 = vmatprep.subr.mxu0 0.0
    %339 = vmatpush1.msra.mxu0 0.0
    %340 = vmatprep.mubr.f32.mxu0 0.0
    %341 = vmatmul.mubr.f32.gmra.mrb[0].mxu0 %v245
    %v342 = vpop.f32.mrb[0].mxu0
    %v343 = vadd.f32 %v274, %v342
    %v344 = vpop.f32.mrb[0].mxu0
    %345 = vmatprep.mubr.f32.mxu0 0.0
    %346 = vmatmul.mubr.f32.gmra.mrb[0].mxu0 %v246
    %v347 = vpop.f32.mrb[0].mxu0
    %v348 = vadd.f32 %v274, %v347
    %v349 = vpop.f32.mrb[0].mxu0
    %350 = vmatprep.mubr.f32.mxu0 0.0
    %351 = vmatmul.mubr.f32.gmra.mrb[0].mxu0 %v247
    %v352 = vpop.f32.mrb[0].mxu0
    %v353 = vadd.f32 %v274, %v352
    %v354 = vpop.f32.mrb[0].mxu0
    %355 = vmatprep.mubr.f32.mxu0 0.0
    %356 = vmatmul.mubr.f32.gmra.mrb[0].mxu0 %v248
    %v357 = vpop.f32.mrb[0].mxu0
    %v358 = vadd.f32 %v274, %v357
    %v359 = vpop.f32.mrb[0].mxu0
    %360 = vmatprep.mubr.f32.mxu0 0.0
    %361 = vmatmul.mubr.f32.gmra.mrb[0].mxu0 %v249
    %v362 = vpop.f32.mrb[0].mxu0
    %v363 = vadd.f32 %v274, %v362
    %v364 = vpop.f32.mrb[0].mxu0
    %365 = vmatprep.mubr.f32.mxu0 0.0
    %366 = vmatmul.mubr.f32.gmra.mrb[0].mxu0 %v250
    %v367 = vpop.f32.mrb[0].mxu0
    %v368 = vadd.f32 %v274, %v367
    %v369 = vpop.f32.mrb[0].mxu0
    %370 = vmatprep.mubr.f32.mxu0 0.0
    %371 = vmatmul.mubr.f32.gmra.mrb[0].mxu0 %v251
    %v372 = vpop.f32.mrb[0].mxu0
    %v373 = vadd.f32 %v274, %v372
    %v374 = vpop.f32.mrb[0].mxu0
    %375 = vmatprep.mubr.f32.mxu0 0.0
    %376 = vmatmul.mubr.f32.gmra.mrb[0].mxu0 %v252
    %v377 = vpop.f32.mrb[0].mxu0
    %v378 = vadd.f32 %v274, %v377
    %v379 = vpop.f32.mrb[0].mxu0
    %380 = vdwg.mxu0
    %v381 = vmax.f32 %v343, 0.0
    %v382 = vmax.f32 %v348, 0.0
    %v383 = vmax.f32 %v353, 0.0
    %v384 = vmax.f32 %v358, 0.0
    %v385 = vmax.f32 %v363, 0.0
    %v386 = vmax.f32 %v368, 0.0
    %v387 = vmax.f32 %v373, 0.0
    %v388 = vmax.f32 %v378, 0.0
    %v389 = vld [vmem:[%s5] sm:$0xff]
    %v390 = vld [vmem:[%s5 + $0x8] sm:$0xff]
    %v391 = vld [vmem:[%s5 + $0x10] sm:$0xff]
    %v392 = vld [vmem:[%s5 + $0x18] sm:$0xff]
    %v393 = vld [vmem:[%s5 + $0x20] sm:$0xff]
    %v394 = vld [vmem:[%s5 + $0x28] sm:$0xff]
    %v395 = vld [vmem:[%s5 + $0x30] sm:$0xff]
    %v396 = vld [vmem:[%s5 + $0x38] sm:$0xff]
    %v397 = vld [vmem:[%s5 + $0x40] sm:$0xff]
    %v398 = vld [vmem:[%s5 + $0x48] sm:$0xff]
    %v399 = vld [vmem:[%s5 + $0x50] sm:$0xff]
    %v400 = vld [vmem:[%s5 + $0x58] sm:$0xff]
    %v401 = vld [vmem:[%s5 + $0x60] sm:$0xff]
    %v402 = vld [vmem:[%s5 + $0x68] sm:$0xff]
    %v403 = vld [vmem:[%s5 + $0x70] sm:$0xff]
    %v404 = vld [vmem:[%s5 + $0x78] sm:$0xff]
    %v405 = vld [vmem:[%s6] sm:$0x1]
    %v407 = vlaneseq
    %v408 = vshrl.u32 %v407, 7
    %v409 = vsub.s32 0, %v408
    %v410 = vrot.slane %v405, %v409
    %412 = vmatprep.subr.mxu0 0.0
    %413 = vmatpush1.msra.mxu0 %v389
    %414 = vmatprep.subr.mxu0 0.0
    %415 = vmatpush1.msra.mxu0 %v390
    %416 = vmatprep.subr.mxu0 0.0
    %417 = vmatpush1.msra.mxu0 %v391
    %418 = vmatprep.subr.mxu0 0.0
    %419 = vmatpush1.msra.mxu0 %v392
    %420 = vmatprep.subr.mxu0 0.0
    %421 = vmatpush1.msra.mxu0 %v393
    %422 = vmatprep.subr.mxu0 0.0
    %423 = vmatpush1.msra.mxu0 %v394
    %424 = vmatprep.subr.mxu0 0.0
    %425 = vmatpush1.msra.mxu0 %v395
    %426 = vmatprep.subr.mxu0 0.0
    %427 = vmatpush1.msra.mxu0 %v396
    %428 = vmatprep.subr.mxu0 0.0
    %429 = vmatpush1.msra.mxu0 %v397
    %430 = vmatprep.subr.mxu0 0.0
    %431 = vmatpush1.msra.mxu0 %v398
    %432 = vmatprep.subr.mxu0 0.0
    %433 = vmatpush1.msra.mxu0 %v399
    %434 = vmatprep.subr.mxu0 0.0
    %435 = vmatpush1.msra.mxu0 %v400
    %436 = vmatprep.subr.mxu0 0.0
    %437 = vmatpush1.msra.mxu0 %v401
    %438 = vmatprep.subr.mxu0 0.0
    %439 = vmatpush1.msra.mxu0 %v402
    %440 = vmatprep.subr.mxu0 0.0
    %441 = vmatpush1.msra.mxu0 %v403
    %442 = vmatprep.subr.mxu0 0.0
    %443 = vmatpush1.msra.mxu0 %v404
    %444 = vmatprep.subr.mxu0 0.0
    %445 = vmatpush1.msra.mxu0 0.0
    %446 = vmatprep.subr.mxu0 0.0
    %447 = vmatpush1.msra.mxu0 0.0
    %448 = vmatprep.subr.mxu0 0.0
    %449 = vmatpush1.msra.mxu0 0.0
    %450 = vmatprep.subr.mxu0 0.0
    %451 = vmatpush1.msra.mxu0 0.0
    %452 = vmatprep.subr.mxu0 0.0
    %453 = vmatpush1.msra.mxu0 0.0
    %454 = vmatprep.subr.mxu0 0.0
    %455 = vmatpush1.msra.mxu0 0.0
    %456 = vmatprep.subr.mxu0 0.0
    %457 = vmatpush1.msra.mxu0 0.0
    %458 = vmatprep.subr.mxu0 0.0
    %459 = vmatpush1.msra.mxu0 0.0
    %460 = vmatprep.subr.mxu0 0.0
    %461 = vmatpush1.msra.mxu0 0.0
    %462 = vmatprep.subr.mxu0 0.0
    %463 = vmatpush1.msra.mxu0 0.0
    %464 = vmatprep.subr.mxu0 0.0
    %465 = vmatpush1.msra.mxu0 0.0
    %466 = vmatprep.subr.mxu0 0.0
    %467 = vmatpush1.msra.mxu0 0.0
    %468 = vmatprep.subr.mxu0 0.0
    %469 = vmatpush1.msra.mxu0 0.0
    %470 = vmatprep.subr.mxu0 0.0
    %471 = vmatpush1.msra.mxu0 0.0
    %472 = vmatprep.subr.mxu0 0.0
    %473 = vmatpush1.msra.mxu0 0.0
    %474 = vmatprep.subr.mxu0 0.0
    %475 = vmatpush1.msra.mxu0 0.0
    %476 = vmatprep.mubr.f32.mxu0 0.0
    %477 = vmatmul.mubr.f32.gmra.mrb[0].mxu0 %v381
    %v478 = vpop.f32.mrb[0].mxu0
    %v479 = vadd.f32 %v410, %v478
    %v480 = vpop.f32.mrb[0].mxu0
    %481 = vmatprep.mubr.f32.mxu0 0.0
    %482 = vmatmul.mubr.f32.gmra.mrb[0].mxu0 %v382
    %v483 = vpop.f32.mrb[0].mxu0
    %v484 = vadd.f32 %v410, %v483
    %v485 = vpop.f32.mrb[0].mxu0
    %486 = vmatprep.mubr.f32.mxu0 0.0
    %487 = vmatmul.mubr.f32.gmra.mrb[0].mxu0 %v383
    %v488 = vpop.f32.mrb[0].mxu0
    %v489 = vadd.f32 %v410, %v488
    %v490 = vpop.f32.mrb[0].mxu0
    %491 = vmatprep.mubr.f32.mxu0 0.0
    %492 = vmatmul.mubr.f32.gmra.mrb[0].mxu0 %v384
    %v493 = vpop.f32.mrb[0].mxu0
    %v494 = vadd.f32 %v410, %v493
    %v495 = vpop.f32.mrb[0].mxu0
    %496 = vmatprep.mubr.f32.mxu0 0.0
    %497 = vmatmul.mubr.f32.gmra.mrb[0].mxu0 %v385
    %v498 = vpop.f32.mrb[0].mxu0
    %v499 = vadd.f32 %v410, %v498
    %v500 = vpop.f32.mrb[0].mxu0
    %501 = vmatprep.mubr.f32.mxu0 0.0
    %502 = vmatmul.mubr.f32.gmra.mrb[0].mxu0 %v386
    %v503 = vpop.f32.mrb[0].mxu0
    %v504 = vadd.f32 %v410, %v503
    %v505 = vpop.f32.mrb[0].mxu0
    %506 = vmatprep.mubr.f32.mxu0 0.0
    %507 = vmatmul.mubr.f32.gmra.mrb[0].mxu0 %v387
    %v508 = vpop.f32.mrb[0].mxu0
    %v509 = vadd.f32 %v410, %v508
    %v510 = vpop.f32.mrb[0].mxu0
    %511 = vmatprep.mubr.f32.mxu0 0.0
    %512 = vmatmul.mubr.f32.gmra.mrb[0].mxu0 %v388
    %v513 = vpop.f32.mrb[0].mxu0
    %v514 = vadd.f32 %v410, %v513
    %v515 = vpop.f32.mrb[0].mxu0
    %516 = vdwg.mxu0
    %v517 = vmax.f32 %v479, 0.0
    %v518 = vmax.f32 %v484, 0.0
    %v519 = vmax.f32 %v489, 0.0
    %v520 = vmax.f32 %v494, 0.0
    %v521 = vmax.f32 %v499, 0.0
    %v522 = vmax.f32 %v504, 0.0
    %v523 = vmax.f32 %v509, 0.0
    %v524 = vmax.f32 %v514, 0.0
    %v525 = vld [vmem:[#allocation7] sm:$0xff]
    %v526 = vld [vmem:[#allocation7 + $0x8] sm:$0xff]
    %v527 = vld [vmem:[#allocation7 + $0x10] sm:$0xff]
    %v528 = vld [vmem:[#allocation7 + $0x18] sm:$0xff]
    %v529 = vld [vmem:[#allocation7 + $0x20] sm:$0xff]
    %v530 = vld [vmem:[#allocation7 + $0x28] sm:$0xff]
    %v531 = vld [vmem:[#allocation7 + $0x30] sm:$0xff]
    %v532 = vld [vmem:[#allocation7 + $0x38] sm:$0xff]
    %v533 = vld [vmem:[#allocation7 + $0x40] sm:$0xff]
    %v534 = vld [vmem:[#allocation7 + $0x48] sm:$0xff]
    %v535 = vld [vmem:[#allocation7 + $0x50] sm:$0xff]
    %v536 = vld [vmem:[#allocation7 + $0x58] sm:$0xff]
    %v537 = vld [vmem:[#allocation7 + $0x60] sm:$0xff]
    %v538 = vld [vmem:[#allocation7 + $0x68] sm:$0xff]
    %v539 = vld [vmem:[#allocation7 + $0x70] sm:$0xff]
    %v540 = vld [vmem:[#allocation7 + $0x78] sm:$0xff]
    %v541 = vld [vmem:[%s8] sm:$0x1]
    %v543 = vlaneseq
    %v544 = vshrl.u32 %v543, 7
    %v545 = vsub.s32 0, %v544
    %v546 = vrot.slane %v541, %v545
    %548 = vmatprep.subr.mxu0 0.0
    %549 = vmatpush1.msra.mxu0 %v525
    %550 = vmatprep.subr.mxu0 0.0
    %551 = vmatpush1.msra.mxu0 %v526
    %552 = vmatprep.subr.mxu0 0.0
    %553 = vmatpush1.msra.mxu0 %v527
    %554 = vmatprep.subr.mxu0 0.0
    %555 = vmatpush1.msra.mxu0 %v528
    %556 = vmatprep.subr.mxu0 0.0
    %557 = vmatpush1.msra.mxu0 %v529
    %558 = vmatprep.subr.mxu0 0.0
    %559 = vmatpush1.msra.mxu0 %v530
    %560 = vmatprep.subr.mxu0 0.0
    %561 = vmatpush1.msra.mxu0 %v531
    %562 = vmatprep.subr.mxu0 0.0
    %563 = vmatpush1.msra.mxu0 %v532
    %564 = vmatprep.subr.mxu0 0.0
    %565 = vmatpush1.msra.mxu0 %v533
    %566 = vmatprep.subr.mxu0 0.0
    %567 = vmatpush1.msra.mxu0 %v534
    %568 = vmatprep.subr.mxu0 0.0
    %569 = vmatpush1.msra.mxu0 %v535
    %570 = vmatprep.subr.mxu0 0.0
    %571 = vmatpush1.msra.mxu0 %v536
    %572 = vmatprep.subr.mxu0 0.0
    %573 = vmatpush1.msra.mxu0 %v537
    %574 = vmatprep.subr.mxu0 0.0
    %575 = vmatpush1.msra.mxu0 %v538
    %576 = vmatprep.subr.mxu0 0.0
    %577 = vmatpush1.msra.mxu0 %v539
    %578 = vmatprep.subr.mxu0 0.0
    %579 = vmatpush1.msra.mxu0 %v540
    %580 = vmatprep.subr.mxu0 0.0
    %581 = vmatpush1.msra.mxu0 0.0
    %582 = vmatprep.subr.mxu0 0.0
    %583 = vmatpush1.msra.mxu0 0.0
    %584 = vmatprep.subr.mxu0 0.0
    %585 = vmatpush1.msra.mxu0 0.0
    %586 = vmatprep.subr.mxu0 0.0
    %587 = vmatpush1.msra.mxu0 0.0
    %588 = vmatprep.subr.mxu0 0.0
    %589 = vmatpush1.msra.mxu0 0.0
    %590 = vmatprep.subr.mxu0 0.0
    %591 = vmatpush1.msra.mxu0 0.0
    %592 = vmatprep.subr.mxu0 0.0
    %593 = vmatpush1.msra.mxu0 0.0
    %594 = vmatprep.subr.mxu0 0.0
    %595 = vmatpush1.msra.mxu0 0.0
    %596 = vmatprep.subr.mxu0 0.0
    %597 = vmatpush1.msra.mxu0 0.0
    %598 = vmatprep.subr.mxu0 0.0
    %599 = vmatpush1.msra.mxu0 0.0
    %600 = vmatprep.subr.mxu0 0.0
    %601 = vmatpush1.msra.mxu0 0.0
    %602 = vmatprep.subr.mxu0 0.0
    %603 = vmatpush1.msra.mxu0 0.0
    %604 = vmatprep.subr.mxu0 0.0
    %605 = vmatpush1.msra.mxu0 0.0
    %606 = vmatprep.subr.mxu0 0.0
    %607 = vmatpush1.msra.mxu0 0.0
    %608 = vmatprep.subr.mxu0 0.0
    %609 = vmatpush1.msra.mxu0 0.0
    %610 = vmatprep.subr.mxu0 0.0
    %611 = vmatpush1.msra.mxu0 0.0
    %612 = vmatprep.mubr.f32.mxu0 0.0
    %613 = vmatmul.mubr.f32.gmra.mrb[0].mxu0 %v517
    %v614 = vpop.f32.mrb[0].mxu0
    %v615 = vadd.f32 %v546, %v614
    %v616 = vpop.f32.mrb[0].mxu0
    %617 = vmatprep.mubr.f32.mxu0 0.0
    %618 = vmatmul.mubr.f32.gmra.mrb[0].mxu0 %v518
    %v619 = vpop.f32.mrb[0].mxu0
    %v620 = vadd.f32 %v546, %v619
    %v621 = vpop.f32.mrb[0].mxu0
    %622 = vmatprep.mubr.f32.mxu0 0.0
    %623 = vmatmul.mubr.f32.gmra.mrb[0].mxu0 %v519
    %v624 = vpop.f32.mrb[0].mxu0
    %v625 = vadd.f32 %v546, %v624
    %v626 = vpop.f32.mrb[0].mxu0
    %627 = vmatprep.mubr.f32.mxu0 0.0
    %628 = vmatmul.mubr.f32.gmra.mrb[0].mxu0 %v520
    %v629 = vpop.f32.mrb[0].mxu0
    %v630 = vadd.f32 %v546, %v629
    %v631 = vpop.f32.mrb[0].mxu0
    %632 = vmatprep.mubr.f32.mxu0 0.0
    %633 = vmatmul.mubr.f32.gmra.mrb[0].mxu0 %v521
    %v634 = vpop.f32.mrb[0].mxu0
    %v635 = vadd.f32 %v546, %v634
    %v636 = vpop.f32.mrb[0].mxu0
    %637 = vmatprep.mubr.f32.mxu0 0.0
    %638 = vmatmul.mubr.f32.gmra.mrb[0].mxu0 %v522
    %v639 = vpop.f32.mrb[0].mxu0
    %v640 = vadd.f32 %v546, %v639
    %v641 = vpop.f32.mrb[0].mxu0
    %642 = vmatprep.mubr.f32.mxu0 0.0
    %643 = vmatmul.mubr.f32.gmra.mrb[0].mxu0 %v523
    %v644 = vpop.f32.mrb[0].mxu0
    %v645 = vadd.f32 %v546, %v644
    %v646 = vpop.f32.mrb[0].mxu0
    %647 = vmatprep.mubr.f32.mxu0 0.0
    %648 = vmatmul.mubr.f32.gmra.mrb[0].mxu0 %v524
    %v649 = vpop.f32.mrb[0].mxu0
    %v650 = vadd.f32 %v546, %v649
    %v651 = vpop.f32.mrb[0].mxu0
    %652 = vdwg.mxu0
    %v653 = vld [vmem:[#allocation8] sm:$0xff]
    %v654 = vld [vmem:[#allocation8 + $0x8] sm:$0xff]
    %v655 = vld [vmem:[#allocation8 + $0x10] sm:$0xff]
    %v656 = vld [vmem:[#allocation8 + $0x18] sm:$0xff]
    %v657 = vld [vmem:[#allocation8 + $0x20] sm:$0xff]
    %v658 = vld [vmem:[#allocation8 + $0x28] sm:$0xff]
    %v659 = vld [vmem:[#allocation8 + $0x30] sm:$0xff]
    %v660 = vld [vmem:[#allocation8 + $0x38] sm:$0xff]
    %v661 = vld [vmem:[#allocation8 + $0x40] sm:$0xff]
    %v662 = vld [vmem:[#allocation8 + $0x48] sm:$0xff]
    %v663 = vld [vmem:[#allocation8 + $0x50] sm:$0xff]
    %v664 = vld [vmem:[#allocation8 + $0x58] sm:$0xff]
    %v665 = vld [vmem:[#allocation8 + $0x60] sm:$0xff]
    %v666 = vld [vmem:[#allocation8 + $0x68] sm:$0xff]
    %v667 = vld [vmem:[#allocation8 + $0x70] sm:$0xff]
    %v668 = vld [vmem:[#allocation8 + $0x78] sm:$0xff]
    %v669 = vld [vmem:[%s10] sm:$0x1]
    %v671 = vlaneseq
    %v672 = vshrl.u32 %v671, 7
    %v673 = vsub.s32 0, %v672
    %v674 = vrot.slane %v669, %v673
    %676 = vmatprep.subr.mxu0 0.0
    %677 = vmatpush1.msra.mxu0 %v653
    %678 = vmatprep.subr.mxu0 0.0
    %679 = vmatpush1.msra.mxu0 %v654
    %680 = vmatprep.subr.mxu0 0.0
    %681 = vmatpush1.msra.mxu0 %v655
    %682 = vmatprep.subr.mxu0 0.0
    %683 = vmatpush1.msra.mxu0 %v656
    %684 = vmatprep.subr.mxu0 0.0
    %685 = vmatpush1.msra.mxu0 %v657
    %686 = vmatprep.subr.mxu0 0.0
    %687 = vmatpush1.msra.mxu0 %v658
    %688 = vmatprep.subr.mxu0 0.0
    %689 = vmatpush1.msra.mxu0 %v659
    %690 = vmatprep.subr.mxu0 0.0
    %691 = vmatpush1.msra.mxu0 %v660
    %692 = vmatprep.subr.mxu0 0.0
    %693 = vmatpush1.msra.mxu0 %v661
    %694 = vmatprep.subr.mxu0 0.0
    %695 = vmatpush1.msra.mxu0 %v662
    %696 = vmatprep.subr.mxu0 0.0
    %697 = vmatpush1.msra.mxu0 %v663
    %698 = vmatprep.subr.mxu0 0.0
    %699 = vmatpush1.msra.mxu0 %v664
    %700 = vmatprep.subr.mxu0 0.0
    %701 = vmatpush1.msra.mxu0 %v665
    %702 = vmatprep.subr.mxu0 0.0
    %703 = vmatpush1.msra.mxu0 %v666
    %704 = vmatprep.subr.mxu0 0.0
    %705 = vmatpush1.msra.mxu0 %v667
    %706 = vmatprep.subr.mxu0 0.0
    %707 = vmatpush1.msra.mxu0 %v668
    %708 = vmatprep.subr.mxu0 0.0
    %709 = vmatpush1.msra.mxu0 0.0
    %710 = vmatprep.subr.mxu0 0.0
    %711 = vmatpush1.msra.mxu0 0.0
    %712 = vmatprep.subr.mxu0 0.0
    %713 = vmatpush1.msra.mxu0 0.0
    %714 = vmatprep.subr.mxu0 0.0
    %715 = vmatpush1.msra.mxu0 0.0
    %716 = vmatprep.subr.mxu0 0.0
    %717 = vmatpush1.msra.mxu0 0.0
    %718 = vmatprep.subr.mxu0 0.0
    %719 = vmatpush1.msra.mxu0 0.0
    %720 = vmatprep.subr.mxu0 0.0
    %721 = vmatpush1.msra.mxu0 0.0
    %722 = vmatprep.subr.mxu0 0.0
    %723 = vmatpush1.msra.mxu0 0.0
    %724 = vmatprep.subr.mxu0 0.0
    %725 = vmatpush1.msra.mxu0 0.0
    %726 = vmatprep.subr.mxu0 0.0
    %727 = vmatpush1.msra.mxu0 0.0
    %728 = vmatprep.subr.mxu0 0.0
    %729 = vmatpush1.msra.mxu0 0.0
    %730 = vmatprep.subr.mxu0 0.0
    %731 = vmatpush1.msra.mxu0 0.0
    %732 = vmatprep.subr.mxu0 0.0
    %733 = vmatpush1.msra.mxu0 0.0
    %734 = vmatprep.subr.mxu0 0.0
    %735 = vmatpush1.msra.mxu0 0.0
    %736 = vmatprep.subr.mxu0 0.0
    %737 = vmatpush1.msra.mxu0 0.0
    %738 = vmatprep.subr.mxu0 0.0
    %739 = vmatpush1.msra.mxu0 0.0
    %740 = vmatprep.mubr.f32.mxu0 0.0
    %741 = vmatmul.mubr.f32.gmra.mrb[0].mxu0 %v615
    %v742 = vpop.f32.mrb[0].mxu0
    %v743 = vadd.f32 %v674, %v742
    %v744 = vpop.f32.mrb[0].mxu0
    %745 = vmatprep.mubr.f32.mxu0 0.0
    %746 = vmatmul.mubr.f32.gmra.mrb[0].mxu0 %v620
    %v747 = vpop.f32.mrb[0].mxu0
    %v748 = vadd.f32 %v674, %v747
    %v749 = vpop.f32.mrb[0].mxu0
    %750 = vmatprep.mubr.f32.mxu0 0.0
    %751 = vmatmul.mubr.f32.gmra.mrb[0].mxu0 %v625
    %v752 = vpop.f32.mrb[0].mxu0
    %v753 = vadd.f32 %v674, %v752
    %v754 = vpop.f32.mrb[0].mxu0
    %755 = vmatprep.mubr.f32.mxu0 0.0
    %756 = vmatmul.mubr.f32.gmra.mrb[0].mxu0 %v630
    %v757 = vpop.f32.mrb[0].mxu0
    %v758 = vadd.f32 %v674, %v757
    %v759 = vpop.f32.mrb[0].mxu0
    %760 = vmatprep.mubr.f32.mxu0 0.0
    %761 = vmatmul.mubr.f32.gmra.mrb[0].mxu0 %v635
    %v762 = vpop.f32.mrb[0].mxu0
    %v763 = vadd.f32 %v674, %v762
    %v764 = vpop.f32.mrb[0].mxu0
    %765 = vmatprep.mubr.f32.mxu0 0.0
    %766 = vmatmul.mubr.f32.gmra.mrb[0].mxu0 %v640
    %v767 = vpop.f32.mrb[0].mxu0
    %v768 = vadd.f32 %v674, %v767
    %v769 = vpop.f32.mrb[0].mxu0
    %770 = vmatprep.mubr.f32.mxu0 0.0
    %771 = vmatmul.mubr.f32.gmra.mrb[0].mxu0 %v645
    %v772 = vpop.f32.mrb[0].mxu0
    %v773 = vadd.f32 %v674, %v772
    %v774 = vpop.f32.mrb[0].mxu0
    %775 = vmatprep.mubr.f32.mxu0 0.0
    %776 = vmatmul.mubr.f32.gmra.mrb[0].mxu0 %v650
    %v777 = vpop.f32.mrb[0].mxu0
    %v778 = vadd.f32 %v674, %v777
    %v779 = vpop.f32.mrb[0].mxu0
    %780 = vdwg.mxu0
    %781 = vst [vmem:[#allocation10] sm:$0xff] %v743
    %782 = vst [vmem:[#allocation10 + $0x8] sm:$0xff] %v748
    %783 = vst [vmem:[#allocation10 + $0x10] sm:$0xff] %v753
    %784 = vst [vmem:[#allocation10 + $0x18] sm:$0xff] %v758
    %785 = vst [vmem:[#allocation10 + $0x20] sm:$0xff] %v763
    %786 = vst [vmem:[#allocation10 + $0x28] sm:$0xff] %v768
    %787 = vst [vmem:[#allocation10 + $0x30] sm:$0xff] %v773
    %788 = vst [vmem:[#allocation10 + $0x38] sm:$0xff] %v778
    // Predicated region
    $region62: #{tpu_custom_call.1} parent=1 // pred_check
      _
    $region63: #{tpu_custom_call.1} parent=1 // pred_check_branch
      %790 = sbr.rel (0) target = $region65
    $region64: #{tpu_custom_call.1} parent=1 // pred_region
      %s792 = ssub.s32 1024, 1024
      %793 = vsyncadd [#allocation4], %s792
      %s794 = sshll.u32 [#allocation10], 4
      %s795 = int_to_ptr.vmem [resolvable:$true] %s794
      %800 = dma.vmem_to_hbm [thread:$0]  %s795, 1024, %s11, [#allocation4], 128, 128, 8
    $region65: #{tpu_custom_call.1} parent=1 // pred_fallthru
      _
    // Predicated region
    $region66: #{tpu_custom_call.1} parent=1 // pred_check
      _
    $region67: #{tpu_custom_call.1} parent=1 // pred_check_branch
      %802 = sbr.rel (0) target = $region69
    $region68: #{tpu_custom_call.1} parent=1 // pred_region
      %803 = dma.done [#allocation4], 1024
    $region69: #{tpu_custom_call.1} parent=1 // pred_fallthru
      _
    %804 = vsyncpa [#allocation3], 1
    %805 = vsyncpa [#allocation6], 1
    %806 = vsyncpa [#allocation9], 1
    %807 = vsyncpa [#allocation4], 1

</llo_original>
